<compile_context>
chip_gen: v5e
topology: v5e:2x2
jax: 0.10.0
libtpu: 0.0.40
codegen_flags: <defaults>
</compile_context>

<pallas_src>
import math

import numpy as np
import jax
import jax.numpy as jnp
from jax.experimental import pallas as pl
from jax.experimental.pallas import tpu as pltpu


def _pick_block_b(B, per_batch_bytes, vmem_budget_bytes=8 * 1024 * 1024, max_bb=32):
    """Largest batch-block BB that (a) divides B, (b) fits a conservative
    double-buffered VMEM budget (sized with v7x's 64 MiB/TC in mind), and
    (c) leaves >= 2 grid steps when possible so both v7x TensorCores get work."""
    cap = max(1, min(max_bb, vmem_budget_bytes // max(1, 2 * per_batch_bytes)))
    divisors = [d for d in range(1, B + 1) if B % d == 0 and d <= cap]
    multi_step = [d for d in divisors if B // d >= 2]
    return max(multi_step) if multi_step else max(divisors)


# ---------------------------------------------------------------------------
# Kernel 1: per-batch-block support statistics
#   posterior_L[b] = phi_s[b]^T phi_s[b] + L        (L hoisted, passed in)
#   rhs[b]         = phi_s[b]^T y_s[b]   + L @ K    (L @ K hoisted, passed in)
# ---------------------------------------------------------------------------
def _support_kernel(l_ref, lk_ref, phi_ref, y_ref, post_l_ref, rhs_ref):
    phi = phi_ref[...]                                    # (BB, N, D)
    y = y_ref[...]                                        # (BB, N, O)
    # Batched MXU contractions over the support axis N, f32 accumulation.
    phit_phi = jnp.einsum('bnd,bne->bde', phi, phi,
                          preferred_element_type=jnp.float32)      # (BB, D, D)
    phit_y = jnp.einsum('bnd,bno->bdo', phi, y,
                        preferred_element_type=jnp.float32)        # (BB, D, O)
    post_l_ref[...] = (phit_phi + l_ref[...][None]).astype(post_l_ref.dtype)
    rhs_ref[...] = (phit_y + lk_ref[...][None]).astype(rhs_ref.dtype)


# ---------------------------------------------------------------------------
# Kernel 2: per-batch-block query predictions + NLL partial sum
#   mu        = phi_q @ posterior_K           (posterior_K precomputed, passed in)
#   spread    = 1 + diag(phi_q @ posterior_L_inv @ phi_q^T)
#   nll_block = sum_{b,q} [ O*(log(spread)+log(sig_eps)) + ||y_q-mu||^2/(spread*sig_eps) ]
# (sig_pred is spread * sig_eps * I, so its inverse / logdet are closed-form.)
# ---------------------------------------------------------------------------
def _make_query_kernel(sig_eps: float, output_dim: int):
    log_sig_eps = math.log(sig_eps)

    def _query_kernel(linv_ref, pk_ref, phiq_ref, yq_ref,
                      mu_ref, spread_ref, nll_ref):
        phiq = phiq_ref[...]                              # (BB, Q, D), compute dtype
        cd = phiq.dtype
        linv = linv_ref[...].astype(cd)                   # (BB, D, D)
        pk = pk_ref[...].astype(cd)                       # (BB, D, O)

        mu = jnp.einsum('bqd,bdo->bqo', phiq, pk,
                        preferred_element_type=jnp.float32)        # (BB, Q, O)
        t = jnp.einsum('bqd,bde->bqe', phiq, linv,
                       preferred_element_type=jnp.float32)         # (BB, Q, D)
        spread = 1.0 + jnp.sum(t * phiq.astype(jnp.float32), axis=-1)   # (BB, Q)

        mu_ref[...] = mu.astype(mu_ref.dtype)
        spread_ref[...] = spread.astype(spread_ref.dtype)           # (BB, Q) lane-dense

        diff = yq_ref[...].astype(jnp.float32) - mu
        quadf = jnp.sum(diff * diff, axis=-1) / (spread * sig_eps)  # (BB, Q)
        logdet = output_dim * (jnp.log(spread) + log_sig_eps)       # (BB, Q)
        nll_ref[...] = jnp.sum(logdet + quadf, keepdims=True).astype(nll_ref.dtype)

    return _query_kernel


# ---------------------------------------------------------------------------
# Wrapper (BLR.forward, nobs > 0 path)
# ---------------------------------------------------------------------------
def blr_forward(phi_support, y_support, phi_query, y_query,
                l_asym, k_par, sig_eps, compute_dtype=jnp.float32):
    B, N, D = phi_support.shape
    O = y_support.shape[-1]
    Q = phi_query.shape[1]
    f32 = jnp.float32
    # TODO(synk): nobs==0 (prior-only) branch of the PyTorch module is not implemented.

    # Batch-invariant parameter terms, hoisted out of the kernels (plain JAX).
    L = jnp.dot(l_asym, l_asym.T, preferred_element_type=f32).astype(f32)   # (D, D)
    LK = jnp.dot(L, k_par, preferred_element_type=f32).astype(f32)          # (D, O)

    # Pick the batch block against a conservative VMEM budget (v7x = 64 MiB/TC,
    # half of v5e/v6e), accounting for double-buffered input/output tiles.
    itemsize = jnp.dtype(compute_dtype).itemsize
    per_batch_bytes = max(
        (N * D + N * O) * itemsize + (D * D + D * O) * 4,          # kernel 1
        (Q * D) * itemsize + (D * D + D * O + 2 * Q * O + Q) * 4,  # kernel 2
    )
    BB = _pick_block_b(B, per_batch_bytes)
    GB = B // BB

    parallel = pltpu.CompilerParams(dimension_semantics=("parallel",))

    # Optional bf16 MXU feed (halves DMA for the big N*D / Q*D operands and
    # uses the 2x bf16 MXU path on v6e/v7x); f32 accumulation is kept inside
    # the kernels.  Default stays f32 for reference-level numerics.
    phi_s = phi_support.astype(compute_dtype)
    y_s = y_support.astype(compute_dtype)
    phi_q = phi_query.astype(compute_dtype)
    y_q = y_query.astype(f32)

    # --- kernel 1: support statistics (BB batches per grid step) -----------
    post_l, rhs = pl.pallas_call(
        _support_kernel,
        grid=(GB,),
        in_specs=[
            pl.BlockSpec((D, D), lambda b: (0, 0)),            # L (batch-invariant)
            pl.BlockSpec((D, O), lambda b: (0, 0)),            # L @ K (batch-invariant)
            pl.BlockSpec((BB, N, D), lambda b: (b, 0, 0)),     # phi_support block
            pl.BlockSpec((BB, N, O), lambda b: (b, 0, 0)),     # y_support block
        ],
        out_specs=(
            pl.BlockSpec((BB, D, D), lambda b: (b, 0, 0)),
            pl.BlockSpec((BB, D, O), lambda b: (b, 0, 0)),
        ),
        out_shape=(
            jax.ShapeDtypeStruct((B, D, D), f32),
            jax.ShapeDtypeStruct((B, D, O), f32),
        ),
        compiler_params=parallel,
    )(L, LK, phi_s, y_s)

    # TODO(synk): batched DxD inverse / solve has no clean Pallas equivalent;
    # done in plain JAX.  posterior_K is computed here ONCE as a batched solve
    # (more stable than inv @ rhs) so kernel 2 neither DMAs `rhs` nor repeats
    # the per-batch (D,D)@(D,O) matmul; the explicit inverse is kept only for
    # the spread quadratic form (matching the reference module).
    post_l_inv = jnp.linalg.inv(post_l)                        # (B, D, D)
    post_k = jnp.linalg.solve(post_l, rhs)                     # (B, D, O)

    # --- kernel 2: predictions + NLL pieces (BB batches per grid step) -----
    mu_pred, spread, nll_blocks = pl.pallas_call(
        _make_query_kernel(float(sig_eps), int(O)),
        grid=(GB,),
        in_specs=[
            pl.BlockSpec((BB, D, D), lambda b: (b, 0, 0)),     # posterior_L_inv
            pl.BlockSpec((BB, D, O), lambda b: (b, 0, 0)),     # posterior_K
            pl.BlockSpec((BB, Q, D), lambda b: (b, 0, 0)),     # phi_query
            pl.BlockSpec((BB, Q, O), lambda b: (b, 0, 0)),     # y_query
        ],
        out_specs=(
            pl.BlockSpec((BB, Q, O), lambda b: (b, 0, 0)),     # mu_pred
            pl.BlockSpec((None, BB, Q), lambda b: (b, 0, 0)),  # spread, (BB,Q) 2-D block
            pl.BlockSpec((None, 1, 1), lambda b: (b, 0, 0)),   # per-block NLL sum
        ),
        out_shape=(
            jax.ShapeDtypeStruct((B, Q, O), f32),
            jax.ShapeDtypeStruct((GB, BB, Q), f32),
            jax.ShapeDtypeStruct((GB, 1, 1), f32),
        ),
        compiler_params=parallel,
    )(post_l_inv, post_k, phi_q, y_q)

    # sig_pred = einsum('...i,jk->...ijk', spread_fac, sig_eps*I)  (broadcast glue;
    # kept dense to preserve the module's return signature).
    spread_fac = spread.reshape(B, Q)
    sig_eps_eye = jnp.eye(O, dtype=f32) * sig_eps
    sig_pred = spread_fac[..., None, None] * sig_eps_eye       # (B, Q, O, O)

    # predictive_nll = logdet.mean() + quadf.mean() over all B*Q elements
    predictive_nll = jnp.sum(nll_blocks) / (B * Q)
    return mu_pred, sig_pred, predictive_nll


# ---------------------------------------------------------------------------
# Pure-JAX reference (mirrors the PyTorch forward, nobs > 0 path)
# ---------------------------------------------------------------------------
def blr_reference(phi_s, y_s, phi_q, y_q, l_asym, k_par, sig_eps):
    O = y_s.shape[-1]
    L = l_asym @ l_asym.T
    post_l = jnp.einsum('bnd,bne->bde', phi_s, phi_s) + L[None]
    post_l_inv = jnp.linalg.inv(post_l)
    post_k = post_l_inv @ (jnp.einsum('bnd,bno->bdo', phi_s, y_s) + (L @ k_par)[None])
    mu = phi_q @ post_k
    spread = 1.0 + jnp.einsum('bqi,bij,bqj->bq', phi_q, post_l_inv, phi_q)
    sig_eps_eye = jnp.eye(O, dtype=jnp.float32) * sig_eps
    sig_pred = spread[..., None, None] * sig_eps_eye
    diff = y_q - mu
    quadf = jnp.einsum('bqi,bqij,bqj->bq', diff, jnp.linalg.inv(sig_pred), diff)
    nll = (O * (jnp.log(spread) + math.log(sig_eps))).mean() + quadf.mean()
    return mu, sig_pred, nll


if __name__ == "__main__":
    B, N, Q, D, O = 8, 16, 8, 8, 4
    sig_eps = 0.1

    key = jax.random.PRNGKey(0)
    k1, k2, k3, k4, k5, k6 = jax.random.split(key, 6)
    phi_support = jax.random.normal(k1, (B, N, D), jnp.float32)
    y_support = jax.random.normal(k2, (B, N, O), jnp.float32)
    phi_query = jax.random.normal(k3, (B, Q, D), jnp.float32)
    y_query = jax.random.normal(k4, (B, Q, O), jnp.float32)
    # Deterministic parameter init (module uses zeros; small random values keep
    # the L / L@K terms non-trivial while staying deterministic via PRNGKey(0)).
    l_asym = 0.3 * jax.random.normal(k5, (D, D), jnp.float32)
    k_par = 0.1 * jax.random.normal(k6, (D, O), jnp.float32)

    mu_pred, sig_pred, nll = blr_forward(
        phi_support, y_support, phi_query, y_query, l_asym, k_par, sig_eps)
    jax.block_until_ready((mu_pred, sig_pred, nll))

    mu_ref, sig_ref, nll_ref = blr_reference(
        phi_support, y_support, phi_query, y_query, l_asym, k_par, sig_eps)

    assert mu_pred.shape == (B, Q, O) and sig_pred.shape == (B, Q, O, O)
    assert np.allclose(np.asarray(mu_pred), np.asarray(mu_ref), rtol=1e-2, atol=1e-2)
    assert np.allclose(np.asarray(sig_pred), np.asarray(sig_ref), rtol=1e-2, atol=1e-2)
    assert np.allclose(float(nll), float(nll_ref), rtol=1e-2, atol=1e-2)

    print("KERNEL_OK")
</pallas_src>

<mosaic_0001>
module attributes {stable_mosaic.version = 11 : i64} {
  func.func @_support_kernel(%arg0: i32, %arg1: memref<8x8xf32, #tpu.memory_space<vmem>>, %arg2: memref<8x4xf32, #tpu.memory_space<vmem>>, %arg3: memref<4x16x8xf32, #tpu.memory_space<vmem>>, %arg4: memref<4x16x4xf32, #tpu.memory_space<vmem>>, %arg5: memref<4x8x8xf32, #tpu.memory_space<vmem>>, %arg6: memref<4x8x4xf32, #tpu.memory_space<vmem>>) attributes {dimension_semantics = [#tpu.dimension_semantics<parallel>], iteration_bounds = array<i64: 2>, scalar_prefetch = 0 : i64, scratch_operands = 0 : i64, tpu.core_type = #tpu.core_type<tc>, window_params = [{pipeline_mode = #tpu.pipeline_mode<synchronous>, transform_indices = @transform_0, window_bounds = array<i64: 8, 8>}, {pipeline_mode = #tpu.pipeline_mode<synchronous>, transform_indices = @transform_1, window_bounds = array<i64: 8, 4>}, {transform_indices = @transform_2, window_bounds = array<i64: 4, 16, 8>}, {transform_indices = @transform_3, window_bounds = array<i64: 4, 16, 4>}, {transform_indices = @transform_4, window_bounds = array<i64: 4, 8, 8>}, {transform_indices = @transform_5, window_bounds = array<i64: 4, 8, 4>}]} {
    %c0 = arith.constant 0 : index
    %c0_0 = arith.constant 0 : index
    %c0_1 = arith.constant 0 : index
    %0 = vector.load %arg3[%c0, %c0_0, %c0_1] : memref<4x16x8xf32, #tpu.memory_space<vmem>>, vector<4x16x8xf32>
    %c0_2 = arith.constant 0 : index
    %c0_3 = arith.constant 0 : index
    %c0_4 = arith.constant 0 : index
    %1 = vector.load %arg4[%c0_2, %c0_3, %c0_4] : memref<4x16x4xf32, #tpu.memory_space<vmem>>, vector<4x16x4xf32>
    "tpu.trace_start"() <{level = 10 : i32, message = "bnd,bne->bde"}> : () -> ()
    %cst = arith.constant dense<0.000000e+00> : vector<4x8x8xf32>
    %2 = tpu.matmul %0, %0, %cst {dimension_numbers = #tpu.dot_dimension_numbers<[1], [1], [2], [2], [0, 0, 0, 2, 1, 2], [0], [0]>} : vector<4x16x8xf32>, vector<4x16x8xf32>, vector<4x8x8xf32> -> vector<4x8x8xf32>
    "tpu.trace_stop"() : () -> ()
    "tpu.trace_start"() <{level = 10 : i32, message = "bnd,bno->bdo"}> : () -> ()
    %cst_5 = arith.constant dense<0.000000e+00> : vector<4x8x4xf32>
    %3 = tpu.matmul %0, %1, %cst_5 {dimension_numbers = #tpu.dot_dimension_numbers<[1], [1], [2], [2], [0, 0, 0, 2, 1, 2], [0], [0]>} : vector<4x16x8xf32>, vector<4x16x4xf32>, vector<4x8x4xf32> -> vector<4x8x4xf32>
    "tpu.trace_stop"() : () -> ()
    %c0_6 = arith.constant 0 : index
    %c0_7 = arith.constant 0 : index
    %4 = vector.load %arg1[%c0_6, %c0_7] : memref<8x8xf32, #tpu.memory_space<vmem>>, vector<8x8xf32>
    %5 = vector.shape_cast %4 : vector<8x8xf32> to vector<1x8x8xf32>
    %6 = vector.broadcast %5 : vector<1x8x8xf32> to vector<4x8x8xf32>
    %7 = arith.addf %2, %6 : vector<4x8x8xf32>
    %c0_8 = arith.constant 0 : index
    %c0_9 = arith.constant 0 : index
    %c0_10 = arith.constant 0 : index
    %8 = vector.load %arg5[%c0_8, %c0_9, %c0_10] : memref<4x8x8xf32, #tpu.memory_space<vmem>>, vector<4x8x8xf32>
    tpu.vector_store %arg5[%c0_8, %c0_9, %c0_10], %7 {strides = array<i32>} : memref<4x8x8xf32, #tpu.memory_space<vmem>>, vector<4x8x8xf32>,
    %c0_11 = arith.constant 0 : index
    %c0_12 = arith.constant 0 : index
    %9 = vector.load %arg2[%c0_11, %c0_12] : memref<8x4xf32, #tpu.memory_space<vmem>>, vector<8x4xf32>
    %10 = vector.shape_cast %9 : vector<8x4xf32> to vector<1x8x4xf32>
    %11 = vector.broadcast %10 : vector<1x8x4xf32> to vector<4x8x4xf32>
    %12 = arith.addf %3, %11 : vector<4x8x4xf32>
    %c0_13 = arith.constant 0 : index
    %c0_14 = arith.constant 0 : index
    %c0_15 = arith.constant 0 : index
    %13 = vector.load %arg6[%c0_13, %c0_14, %c0_15] : memref<4x8x4xf32, #tpu.memory_space<vmem>>, vector<4x8x4xf32>
    tpu.vector_store %arg6[%c0_13, %c0_14, %c0_15], %12 {strides = array<i32>} : memref<4x8x4xf32, #tpu.memory_space<vmem>>, vector<4x8x4xf32>,
    return
  }
  func.func @transform_0(%arg0: i32) -> (i32, i32) {
    %c0_i32 = arith.constant 0 : i32
    %c0_i32_0 = arith.constant 0 : i32
    %c0_i32_1 = arith.constant 0 : i32
    return %c0_i32, %c0_i32_0 : i32, i32
  }
  func.func @transform_1(%arg0: i32) -> (i32, i32) {
    %c0_i32 = arith.constant 0 : i32
    %c0_i32_0 = arith.constant 0 : i32
    %c0_i32_1 = arith.constant 0 : i32
    return %c0_i32, %c0_i32_0 : i32, i32
  }
  func.func @transform_2(%arg0: i32) -> (i32, i32, i32) {
    %c0_i32 = arith.constant 0 : i32
    %c0_i32_0 = arith.constant 0 : i32
    %c0_i32_1 = arith.constant 0 : i32
    return %arg0, %c0_i32, %c0_i32_0 : i32, i32, i32
  }
  func.func @transform_3(%arg0: i32) -> (i32, i32, i32) {
    %c0_i32 = arith.constant 0 : i32
    %c0_i32_0 = arith.constant 0 : i32
    %c0_i32_1 = arith.constant 0 : i32
    return %arg0, %c0_i32, %c0_i32_0 : i32, i32, i32
  }
  func.func @transform_4(%arg0: i32) -> (i32, i32, i32) {
    %c0_i32 = arith.constant 0 : i32
    %c0_i32_0 = arith.constant 0 : i32
    %c0_i32_1 = arith.constant 0 : i32
    return %arg0, %c0_i32, %c0_i32_0 : i32, i32, i32
  }
  func.func @transform_5(%arg0: i32) -> (i32, i32, i32) {
    %c0_i32 = arith.constant 0 : i32
    %c0_i32_0 = arith.constant 0 : i32
    %c0_i32_1 = arith.constant 0 : i32
    return %arg0, %c0_i32, %c0_i32_0 : i32, i32, i32
  }
}

</mosaic_0001>

<llo_original>
// kernel: tpu_custom_call.1
$region0: #{tpu_custom_call.1}
  #allocation0 [shape = 'u32[]', space=smem, size = 0x4, offset = 0x4, fixed_abs, tag = 'smem constant byte address 0x4 - core index']
  #allocation1 [shape = 'u32[72,128]{1,0:T(1,128)}', space=vmem, size = 0x9000, scoped, tag = 'internal scratch']
  %s0 = inlined_call_operand.vmem [shape: f32[8,8], index: 0, kind: input, shape index: {}]
  %s1 = inlined_call_operand.vmem [shape: f32[8,4], index: 1, kind: input, shape index: {}]
  %s2 = inlined_call_operand.vmem [shape: f32[8,16,8], index: 2, kind: input, shape index: {}]
  %s3 = inlined_call_operand.vmem [shape: f32[8,16,4], index: 3, kind: input, shape index: {}]
  %s4 = inlined_call_operand.hbm [shape: f32[8,8,8], index: 4, kind: output, shape index: {0}]
  %s5 = inlined_call_operand.vmem [shape: f32[8,8,4], index: 5, kind: output, shape index: {1}]
  %6 = xla_tuple %s4, %s5
  %s7 = sld [smem:[#allocation0]]
  $region57: #{tpu_custom_call.1} parent=0
    _
  %s9 = ssub.s32 1, %s7
  %s10 = scalar_select 0, %s9, %s7
  $region1: #{tpu_custom_call.1} parent=0
    #allocation2 [shape = 'u8[32768]{0}', space=vmem, size = 0x8000, scoped, tag = 'output window, operand 0']
    #allocation3 [shape = 's32[2]{0}', space=sflag, size = 0x8, scoped, tag = 'scoped memory for tpu_custom_call.1']
    %11 = vsyncpa [#allocation3], 0
    %s12 = scalar_lea.sflag [#allocation3], 1
    %13 = vsyncpa %s12, 0
    loop: start=0, step=1, limit=4
    $region2: #{tpu_custom_call.1} parent=1 // loop_pre_header
      _
    $region3: #{tpu_custom_call.1} parent=1 // loop_header
      %s15 = sphi 0, %s19
      %p16 = scmp.ge.s32.totalorder %s15, 4
      %s23 = sphi 0, %s23
      %s25 = sphi 0, %s23
      %s26 = sphi 0, %s25
      %s40 = sphi 0, %s26
      %s44 = sphi 0, %s44
      %s46 = sphi 0, %s44
      %s47 = sphi 0, %s46
      %s61 = sphi 0, %s47
      %s67 = sphi 0, %s69
      %s70 = sphi 0, %s67
      %s71 = sphi 0, %s70
      %s87 = sphi 0, %s71
      %s93 = sphi 0, %s95
      %s96 = sphi 0, %s93
      %s97 = sphi 0, %s96
      %s113 = sphi 0, %s97
      %s119 = sphi 0, %s121
      %s122 = sphi 0, %s119
      %s123 = sphi 0, %s122
      %s139 = sphi 0, %s123
      %s145 = sphi 0, %s147
      %s148 = sphi 0, %s145
      %s149 = sphi 0, %s148
      %s165 = sphi 0, %s149
    $region4: #{tpu_custom_call.1} parent=1 // loop_header_branch
      %18 = sbr.rel (%p16) target = $region8
    $region5: #{tpu_custom_call.1} parent=1 // loop_body
      %s20 = ssub.s32 %s15, 1
      %s21 = ssub.s32 %s15, 2
      %s22 = sadd.s32 %s15, 1
      %s24 = sadd.s32 %s23, 1
      %p27 = scmp.eq.s32.totalorder %s15, 1
      %p28 = scmp.ne.s32.totalorder %s23, %s25
      %p29 = scmp.eq.s32.totalorder %s15, 0
      %p30 = por %p28, %p29
      %p31 = scmp.ne.s32.totalorder %s23, %s25
      %p32 = scmp.eq.s32.totalorder %s20, 1
      %p33 = por %p31, %p32
      %p34 = scmp.ne.s32.totalorder %s25, %s26
      %p35 = scmp.eq.s32.totalorder %s20, 0
      %p36 = por %p34, %p35
      %p37 = scmp.ne.s32.totalorder %s25, %s26
      %p38 = scmp.eq.s32.totalorder %s21, 1
      %p39 = por %p37, %p38
      %p41 = scmp.ne.s32.totalorder %s26, %s40
      %p42 = scmp.eq.s32.totalorder %s21, 0
      %p43 = por %p41, %p42
      %s45 = sadd.s32 %s44, 1
      %p48 = scmp.eq.s32.totalorder %s15, 1
      %p49 = scmp.ne.s32.totalorder %s44, %s46
      %p50 = scmp.eq.s32.totalorder %s15, 0
      %p51 = por %p49, %p50
      %p52 = scmp.ne.s32.totalorder %s44, %s46
      %p53 = scmp.eq.s32.totalorder %s20, 1
      %p54 = por %p52, %p53
      %p55 = scmp.ne.s32.totalorder %s46, %s47
      %p56 = scmp.eq.s32.totalorder %s20, 0
      %p57 = por %p55, %p56
      %p58 = scmp.ne.s32.totalorder %s46, %s47
      %p59 = scmp.eq.s32.totalorder %s21, 1
      %p60 = por %p58, %p59
      %p62 = scmp.ne.s32.totalorder %s47, %s61
      %p63 = scmp.eq.s32.totalorder %s21, 0
      %p64 = por %p62, %p63
      %s65 = ssub.s32 %s15, %s22
      %p66 = scmp.eq.s32.totalorder %s65, 0
      %s68 = sadd.s32 %s67, 1
      %s69 = scalar_select %p66, %s67, %s68
      %p72 = pneg %p66
      %p73 = scmp.eq.s32.totalorder %s15, 1
      %p74 = por %p72, %p73
      %p75 = scmp.ne.s32.totalorder %s67, %s70
      %p76 = scmp.eq.s32.totalorder %s15, 0
      %p77 = por %p75, %p76
      %p78 = scmp.ne.s32.totalorder %s67, %s70
      %p79 = scmp.eq.s32.totalorder %s20, 1
      %p80 = por %p78, %p79
      %p81 = scmp.ne.s32.totalorder %s70, %s71
      %p82 = scmp.eq.s32.totalorder %s20, 0
      %p83 = por %p81, %p82
      %p84 = scmp.ne.s32.totalorder %s70, %s71
      %p85 = scmp.eq.s32.totalorder %s21, 1
      %p86 = por %p84, %p85
      %p88 = scmp.ne.s32.totalorder %s71, %s87
      %p89 = scmp.eq.s32.totalorder %s21, 0
      %p90 = por %p88, %p89
      %s91 = ssub.s32 %s15, %s22
      %p92 = scmp.eq.s32.totalorder %s91, 0
      %s94 = sadd.s32 %s93, 1
      %s95 = scalar_select %p92, %s93, %s94
      %p98 = pneg %p92
      %p99 = scmp.eq.s32.totalorder %s15, 1
      %p100 = por %p98, %p99
      %p101 = scmp.ne.s32.totalorder %s93, %s96
      %p102 = scmp.eq.s32.totalorder %s15, 0
      %p103 = por %p101, %p102
      %p104 = scmp.ne.s32.totalorder %s93, %s96
      %p105 = scmp.eq.s32.totalorder %s20, 1
      %p106 = por %p104, %p105
      %p107 = scmp.ne.s32.totalorder %s96, %s97
      %p108 = scmp.eq.s32.totalorder %s20, 0
      %p109 = por %p107, %p108
      %p110 = scmp.ne.s32.totalorder %s96, %s97
      %p111 = scmp.eq.s32.totalorder %s21, 1
      %p112 = por %p110, %p111
      %p114 = scmp.ne.s32.totalorder %s97, %s113
      %p115 = scmp.eq.s32.totalorder %s21, 0
      %p116 = por %p114, %p115
      %s117 = ssub.s32 %s15, %s22
      %p118 = scmp.eq.s32.totalorder %s117, 0
      %s120 = sadd.s32 %s119, 1
      %s121 = scalar_select %p118, %s119, %s120
      %p124 = pneg %p118
      %p125 = scmp.eq.s32.totalorder %s15, 1
      %p126 = por %p124, %p125
      %p127 = scmp.ne.s32.totalorder %s119, %s122
      %p128 = scmp.eq.s32.totalorder %s15, 0
      %p129 = por %p127, %p128
      %p130 = scmp.ne.s32.totalorder %s119, %s122
      %p131 = scmp.eq.s32.totalorder %s20, 1
      %p132 = por %p130, %p131
      %p133 = scmp.ne.s32.totalorder %s122, %s123
      %p134 = scmp.eq.s32.totalorder %s20, 0
      %p135 = por %p133, %p134
      %p136 = scmp.ne.s32.totalorder %s122, %s123
      %p137 = scmp.eq.s32.totalorder %s21, 1
      %p138 = por %p136, %p137
      %p140 = scmp.ne.s32.totalorder %s123, %s139
      %p141 = scmp.eq.s32.totalorder %s21, 0
      %p142 = por %p140, %p141
      %s143 = ssub.s32 %s15, %s22
      %p144 = scmp.eq.s32.totalorder %s143, 0
      %s146 = sadd.s32 %s145, 1
      %s147 = scalar_select %p144, %s145, %s146
      %p150 = pneg %p144
      %p151 = scmp.eq.s32.totalorder %s15, 1
      %p152 = por %p150, %p151
      %p153 = scmp.ne.s32.totalorder %s145, %s148
      %p154 = scmp.eq.s32.totalorder %s15, 0
      %p155 = por %p153, %p154
      %p156 = scmp.ne.s32.totalorder %s145, %s148
      %p157 = scmp.eq.s32.totalorder %s20, 1
      %p158 = por %p156, %p157
      %p159 = scmp.ne.s32.totalorder %s148, %s149
      %p160 = scmp.eq.s32.totalorder %s20, 0
      %p161 = por %p159, %p160
      %p162 = scmp.ne.s32.totalorder %s148, %s149
      %p163 = scmp.eq.s32.totalorder %s21, 1
      %p164 = por %p162, %p163
      %p166 = scmp.ne.s32.totalorder %s149, %s165
      %p167 = scmp.eq.s32.totalorder %s21, 0
      %p168 = por %p166, %p167
      %p169 = scmp.le.s32.totalorder 1, %s15
      %p170 = scmp.lt.s32.totalorder %s15, 3
      %p171 = pnand %p169, %p170
      %p172 = pneg %p171
      // Predicated region
      $region9: #{tpu_custom_call.1} parent=5 // pred_check
        _
      $region10: #{tpu_custom_call.1} parent=5 // pred_check_branch
        %174 = sbr.rel (%p171) target = $region12
      $region11: #{tpu_custom_call.1} parent=5 // pred_region
        %s175 = ssub.s32 %s15, 1
        // Predicated region
        $region13: #{tpu_custom_call.1} parent=11 // pred_check
          %p176 = pneg %p36
        $region14: #{tpu_custom_call.1} parent=11 // pred_check_branch
          %178 = sbr.rel (%p176) target = $region16
        $region15: #{tpu_custom_call.1} parent=11 // pred_region
          _
        $region16: #{tpu_custom_call.1} parent=11 // pred_fallthru
          _
        // Predicated region
        $region17: #{tpu_custom_call.1} parent=11 // pred_check
          %p179 = pneg %p57
        $region18: #{tpu_custom_call.1} parent=11 // pred_check_branch
          %181 = sbr.rel (%p179) target = $region20
        $region19: #{tpu_custom_call.1} parent=11 // pred_region
          _
        $region20: #{tpu_custom_call.1} parent=11 // pred_fallthru
          _
      $region12: #{tpu_custom_call.1} parent=5 // pred_fallthru
        _
      %p182 = scmp.lt.s32.totalorder %s15, 2
      // Predicated region
      $region21: #{tpu_custom_call.1} parent=5 // pred_check
        %p183 = pneg %p182
      $region22: #{tpu_custom_call.1} parent=5 // pred_check_branch
        %185 = sbr.rel (%p183) target = $region24
      $region23: #{tpu_custom_call.1} parent=5 // pred_region
        // Predicated region
        $region25: #{tpu_custom_call.1} parent=23 // pred_check
          %p186 = pneg %p77
        $region26: #{tpu_custom_call.1} parent=23 // pred_check_branch
          %188 = sbr.rel (%p186) target = $region28
        $region27: #{tpu_custom_call.1} parent=23 // pred_region
          %s189 = smul.u32 4, %s15
          %p190 = scmp.lt.s32.totalorder %s189, 7
          %s191 = scalar_select %p190, %s189, 7
          %s192 = smul.addr %s191, 2
          %s193 = smul.addr %s192, 8
          %s194 = scalar_lea.vmem %s2, %s193
          %s195 = smul.u32 4, %s15
        $region28: #{tpu_custom_call.1} parent=23 // pred_fallthru
          _
        // Predicated region
        $region29: #{tpu_custom_call.1} parent=23 // pred_check
          %p196 = pneg %p103
        $region30: #{tpu_custom_call.1} parent=23 // pred_check_branch
          %198 = sbr.rel (%p196) target = $region32
        $region31: #{tpu_custom_call.1} parent=23 // pred_region
          %s199 = smul.u32 4, %s15
          %p200 = scmp.lt.s32.totalorder %s199, 7
          %s201 = scalar_select %p200, %s199, 7
          %s202 = smul.addr %s201, 2
          %s203 = smul.addr %s202, 8
          %s204 = scalar_lea.vmem %s3, %s203
          %s205 = smul.u32 4, %s15
        $region32: #{tpu_custom_call.1} parent=23 // pred_fallthru
          _
      $region24: #{tpu_custom_call.1} parent=5 // pred_fallthru
        _
      %p206 = scmp.le.s32.totalorder 1, %s15
      %p207 = scmp.lt.s32.totalorder %s15, 3
      %p208 = pnand %p206, %p207
      %p209 = pneg %p208
      // Predicated region
      $region33: #{tpu_custom_call.1} parent=5 // pred_check
        _
      $region34: #{tpu_custom_call.1} parent=5 // pred_check_branch
        %211 = sbr.rel (%p208) target = $region36
      $region35: #{tpu_custom_call.1} parent=5 // pred_region
        %s212 = ssub.s32 %s15, 1
        %p213 = pneg %p36
        %p214 = pneg %p33
        %p215 = pneg %p57
        %p216 = pneg %p54
        %s217 = smul.u32 4, %s20
        %p218 = scmp.lt.s32.totalorder %s217, 7
        %s219 = scalar_select %p218, %s217, 7
        %s220 = smul.addr %s219, 2
        %s221 = smul.addr %s220, 8
        %s222 = scalar_lea.vmem %s2, %s221
        %p223 = pneg %p83
        %p224 = pneg %p80
        %s225 = smul.u32 4, %s20
        %p226 = scmp.lt.s32.totalorder %s225, 7
        %s227 = scalar_select %p226, %s225, 7
        %s228 = smul.addr %s227, 2
        %s229 = smul.addr %s228, 8
        %s230 = scalar_lea.vmem %s3, %s229
        %p231 = pneg %p109
        %p232 = pneg %p106
        %p233 = pneg %p135
        %p234 = pneg %p132
        %s235 = sand.u32 %s122, 1
        %s236 = scalar_lea.sflag [#allocation3], %s235
        %s237 = sand.u32 %s122, 1
        %s238 = smul.addr %s237, 32
        %s239 = scalar_lea.vmem [#allocation2], %s238
        %p240 = pneg %p161
        %p241 = pneg %p158
        %s242 = smul.u32 4, %s20
        %p243 = scmp.lt.s32.totalorder %s242, 7
        %s244 = scalar_select %p243, %s242, 7
        %s245 = smul.addr %s244, 8
        %s246 = scalar_lea.vmem %s5, %s245
        %s247 = smul.u32 4, %s20
        %p248 = scmp.lt.s32.totalorder %s247, 7
        %s249 = scalar_select %p248, %s247, 7
        %s250 = smul.addr %s249, 2
        %s251 = smul.addr %s250, 8
        %s252 = scalar_lea.vmem %s2, %s251
        %s253 = smul.u32 4, %s20
        %s254 = smul.u32 4, %s20
        %p255 = scmp.lt.s32.totalorder %s254, 7
        %s256 = scalar_select %p255, %s254, 7
        %s257 = smul.addr %s256, 2
        %s258 = smul.addr %s257, 8
        %s259 = scalar_lea.vmem %s3, %s258
        %s260 = smul.u32 4, %s20
        %s261 = smul.u32 4, %s20
        %s262 = smul.u32 4, %s20
        %p263 = scmp.lt.s32.totalorder %s262, 7
        %s264 = scalar_select %p263, %s262, 7
        %s265 = smul.addr %s264, 8
        %s266 = scalar_lea.vmem %s5, %s265
        %s267 = smul.u32 4, %s20
        %v268 = vld [vmem:[%s252] sm:$0xff]
        %v269 = vld [vmem:[%s252 + $0x8] sm:$0xff]
        %v270 = vld [vmem:[%s252 + $0x10] sm:$0xff]
        %v271 = vld [vmem:[%s252 + $0x18] sm:$0xff]
        %v272 = vld [vmem:[%s252 + $0x20] sm:$0xff]
        %v273 = vld [vmem:[%s252 + $0x28] sm:$0xff]
        %v274 = vld [vmem:[%s252 + $0x30] sm:$0xff]
        %v275 = vld [vmem:[%s252 + $0x38] sm:$0xff]
        %v276 = vld [vmem:[%s259] sm:$0xff]
        %v277 = vld [vmem:[%s259 + $0x8] sm:$0xff]
        %v278 = vld [vmem:[%s259 + $0x10] sm:$0xff]
        %v279 = vld [vmem:[%s259 + $0x18] sm:$0xff]
        %v280 = vld [vmem:[%s259 + $0x20] sm:$0xff]
        %v281 = vld [vmem:[%s259 + $0x28] sm:$0xff]
        %v282 = vld [vmem:[%s259 + $0x30] sm:$0xff]
        %v283 = vld [vmem:[%s259 + $0x38] sm:$0xff]
        %v284 = vld [vmem:[%s0] sm:$0xff]
        %285 = vxpose.xlu0.b32.start [1/16] %v268, 128
        %286 = vxpose.xlu0.b32.cont [2/16] %v269, 128
        %287 = vxpose.xlu0.b32.cont [3/16] 0.0, 128
        %288 = vxpose.xlu0.b32.cont [4/16] 0.0, 128
        %289 = vxpose.xlu0.b32.cont [5/16] 0.0, 128
        %290 = vxpose.xlu0.b32.cont [6/16] 0.0, 128
        %291 = vxpose.xlu0.b32.cont [7/16] 0.0, 128
        %292 = vxpose.xlu0.b32.cont [8/16] 0.0, 128
        %293 = vxpose.xlu0.b32.cont [9/16] 0.0, 128
        %294 = vxpose.xlu0.b32.cont [10/16] 0.0, 128
        %295 = vxpose.xlu0.b32.cont [11/16] 0.0, 128
        %296 = vxpose.xlu0.b32.cont [12/16] 0.0, 128
        %297 = vxpose.xlu0.b32.cont [13/16] 0.0, 128
        %298 = vxpose.xlu0.b32.cont [14/16] 0.0, 128
        %299 = vxpose.xlu0.b32.cont [15/16] 0.0, 128
        %300 = vxpose.xlu0.b32.end [16/16] 0.0, 128
        %v301 = vpop.trf.xlu0
        %v302 = vpop.trf.xlu0
        %v303 = vpop.trf.xlu0
        %v304 = vpop.trf.xlu0
        %v305 = vpop.trf.xlu0
        %v306 = vpop.trf.xlu0
        %v307 = vpop.trf.xlu0
        %v308 = vpop.trf.xlu0
        %v309 = vpop.trf.xlu0
        %v310 = vpop.trf.xlu0
        %v311 = vpop.trf.xlu0
        %v312 = vpop.trf.xlu0
        %v313 = vpop.trf.xlu0
        %v314 = vpop.trf.xlu0
        %v315 = vpop.trf.xlu0
        %v316 = vpop.trf.xlu0
        %vm317 = vcmask 130048
        %v319 = vsel %vm317, %v301, 0
        %321 = vmatpush.msra.mxu0 0.0
        %322 = vmatpush.msra.mxu0 0.0
        %323 = vmatpush.msra.mxu0 0.0
        %324 = vmatpush.msra.mxu0 0.0
        %325 = vmatpush.msra.mxu0 0.0
        %326 = vmatpush.msra.mxu0 0.0
        %327 = vmatpush.msra.mxu0 0.0
        %328 = vmatpush.msra.mxu0 0.0
        %329 = vmatpush.msra.mxu0 0.0
        %330 = vmatpush.msra.mxu0 0.0
        %331 = vmatpush.msra.mxu0 0.0
        %332 = vmatpush.msra.mxu0 0.0
        %333 = vmatpush.msra.mxu0 0.0
        %334 = vmatpush.msra.mxu0 0.0
        %335 = vmatpush.msra.mxu0 %v269
        %336 = vmatpush.msra.mxu0 %v268
        %337 = vmatmul.f32.gmra.mxu0 %v319
        %v338 = vpop.f32.mrf.mxu0
        %v339 = vadd.f32 %v284, %v338
        %340 = vdwg.mxu0
        %341 = vxpose.xlu0.b32.start [1/16] %v270, 128
        %342 = vxpose.xlu0.b32.cont [2/16] %v271, 128
        %343 = vxpose.xlu0.b32.cont [3/16] 0.0, 128
        %344 = vxpose.xlu0.b32.cont [4/16] 0.0, 128
        %345 = vxpose.xlu0.b32.cont [5/16] 0.0, 128
        %346 = vxpose.xlu0.b32.cont [6/16] 0.0, 128
        %347 = vxpose.xlu0.b32.cont [7/16] 0.0, 128
        %348 = vxpose.xlu0.b32.cont [8/16] 0.0, 128
        %349 = vxpose.xlu0.b32.cont [9/16] 0.0, 128
        %350 = vxpose.xlu0.b32.cont [10/16] 0.0, 128
        %351 = vxpose.xlu0.b32.cont [11/16] 0.0, 128
        %352 = vxpose.xlu0.b32.cont [12/16] 0.0, 128
        %353 = vxpose.xlu0.b32.cont [13/16] 0.0, 128
        %354 = vxpose.xlu0.b32.cont [14/16] 0.0, 128
        %355 = vxpose.xlu0.b32.cont [15/16] 0.0, 128
        %356 = vxpose.xlu0.b32.end [16/16] 0.0, 128
        %v357 = vpop.trf.xlu0
        %v358 = vpop.trf.xlu0
        %v359 = vpop.trf.xlu0
        %v360 = vpop.trf.xlu0
        %v361 = vpop.trf.xlu0
        %v362 = vpop.trf.xlu0
        %v363 = vpop.trf.xlu0
        %v364 = vpop.trf.xlu0
        %v365 = vpop.trf.xlu0
        %v366 = vpop.trf.xlu0
        %v367 = vpop.trf.xlu0
        %v368 = vpop.trf.xlu0
        %v369 = vpop.trf.xlu0
        %v370 = vpop.trf.xlu0
        %v371 = vpop.trf.xlu0
        %v372 = vpop.trf.xlu0
        %v374 = vsel %vm317, %v357, 0
        %376 = vmatpush.msra.mxu0 0.0
        %377 = vmatpush.msra.mxu0 0.0
        %378 = vmatpush.msra.mxu0 0.0
        %379 = vmatpush.msra.mxu0 0.0
        %380 = vmatpush.msra.mxu0 0.0
        %381 = vmatpush.msra.mxu0 0.0
        %382 = vmatpush.msra.mxu0 0.0
        %383 = vmatpush.msra.mxu0 0.0
        %384 = vmatpush.msra.mxu0 0.0
        %385 = vmatpush.msra.mxu0 0.0
        %386 = vmatpush.msra.mxu0 0.0
        %387 = vmatpush.msra.mxu0 0.0
        %388 = vmatpush.msra.mxu0 0.0
        %389 = vmatpush.msra.mxu0 0.0
        %390 = vmatpush.msra.mxu0 %v271
        %391 = vmatpush.msra.mxu0 %v270
        %392 = vmatmul.f32.gmra.mxu0 %v374
        %v393 = vpop.f32.mrf.mxu0
        %v394 = vadd.f32 %v284, %v393
        %395 = vdwg.mxu0
        %396 = vxpose.xlu0.b32.start [1/16] %v272, 128
        %397 = vxpose.xlu0.b32.cont [2/16] %v273, 128
        %398 = vxpose.xlu0.b32.cont [3/16] 0.0, 128
        %399 = vxpose.xlu0.b32.cont [4/16] 0.0, 128
        %400 = vxpose.xlu0.b32.cont [5/16] 0.0, 128
        %401 = vxpose.xlu0.b32.cont [6/16] 0.0, 128
        %402 = vxpose.xlu0.b32.cont [7/16] 0.0, 128
        %403 = vxpose.xlu0.b32.cont [8/16] 0.0, 128
        %404 = vxpose.xlu0.b32.cont [9/16] 0.0, 128
        %405 = vxpose.xlu0.b32.cont [10/16] 0.0, 128
        %406 = vxpose.xlu0.b32.cont [11/16] 0.0, 128
        %407 = vxpose.xlu0.b32.cont [12/16] 0.0, 128
        %408 = vxpose.xlu0.b32.cont [13/16] 0.0, 128
        %409 = vxpose.xlu0.b32.cont [14/16] 0.0, 128
        %410 = vxpose.xlu0.b32.cont [15/16] 0.0, 128
        %411 = vxpose.xlu0.b32.end [16/16] 0.0, 128
        %v412 = vpop.trf.xlu0
        %v413 = vpop.trf.xlu0
        %v414 = vpop.trf.xlu0
        %v415 = vpop.trf.xlu0
        %v416 = vpop.trf.xlu0
        %v417 = vpop.trf.xlu0
        %v418 = vpop.trf.xlu0
        %v419 = vpop.trf.xlu0
        %v420 = vpop.trf.xlu0
        %v421 = vpop.trf.xlu0
        %v422 = vpop.trf.xlu0
        %v423 = vpop.trf.xlu0
        %v424 = vpop.trf.xlu0
        %v425 = vpop.trf.xlu0
        %v426 = vpop.trf.xlu0
        %v427 = vpop.trf.xlu0
        %v429 = vsel %vm317, %v412, 0
        %431 = vmatpush.msra.mxu0 0.0
        %432 = vmatpush.msra.mxu0 0.0
        %433 = vmatpush.msra.mxu0 0.0
        %434 = vmatpush.msra.mxu0 0.0
        %435 = vmatpush.msra.mxu0 0.0
        %436 = vmatpush.msra.mxu0 0.0
        %437 = vmatpush.msra.mxu0 0.0
        %438 = vmatpush.msra.mxu0 0.0
        %439 = vmatpush.msra.mxu0 0.0
        %440 = vmatpush.msra.mxu0 0.0
        %441 = vmatpush.msra.mxu0 0.0
        %442 = vmatpush.msra.mxu0 0.0
        %443 = vmatpush.msra.mxu0 0.0
        %444 = vmatpush.msra.mxu0 0.0
        %445 = vmatpush.msra.mxu0 %v273
        %446 = vmatpush.msra.mxu0 %v272
        %447 = vmatmul.f32.gmra.mxu0 %v429
        %v448 = vpop.f32.mrf.mxu0
        %v449 = vadd.f32 %v284, %v448
        %450 = vdwg.mxu0
        %451 = vxpose.xlu0.b32.start [1/16] %v274, 128
        %452 = vxpose.xlu0.b32.cont [2/16] %v275, 128
        %453 = vxpose.xlu0.b32.cont [3/16] 0.0, 128
        %454 = vxpose.xlu0.b32.cont [4/16] 0.0, 128
        %455 = vxpose.xlu0.b32.cont [5/16] 0.0, 128
        %456 = vxpose.xlu0.b32.cont [6/16] 0.0, 128
        %457 = vxpose.xlu0.b32.cont [7/16] 0.0, 128
        %458 = vxpose.xlu0.b32.cont [8/16] 0.0, 128
        %459 = vxpose.xlu0.b32.cont [9/16] 0.0, 128
        %460 = vxpose.xlu0.b32.cont [10/16] 0.0, 128
        %461 = vxpose.xlu0.b32.cont [11/16] 0.0, 128
        %462 = vxpose.xlu0.b32.cont [12/16] 0.0, 128
        %463 = vxpose.xlu0.b32.cont [13/16] 0.0, 128
        %464 = vxpose.xlu0.b32.cont [14/16] 0.0, 128
        %465 = vxpose.xlu0.b32.cont [15/16] 0.0, 128
        %466 = vxpose.xlu0.b32.end [16/16] 0.0, 128
        %v467 = vpop.trf.xlu0
        %v468 = vpop.trf.xlu0
        %v469 = vpop.trf.xlu0
        %v470 = vpop.trf.xlu0
        %v471 = vpop.trf.xlu0
        %v472 = vpop.trf.xlu0
        %v473 = vpop.trf.xlu0
        %v474 = vpop.trf.xlu0
        %v475 = vpop.trf.xlu0
        %v476 = vpop.trf.xlu0
        %v477 = vpop.trf.xlu0
        %v478 = vpop.trf.xlu0
        %v479 = vpop.trf.xlu0
        %v480 = vpop.trf.xlu0
        %v481 = vpop.trf.xlu0
        %v482 = vpop.trf.xlu0
        %v484 = vsel %vm317, %v467, 0
        %486 = vmatpush.msra.mxu0 0.0
        %487 = vmatpush.msra.mxu0 0.0
        %488 = vmatpush.msra.mxu0 0.0
        %489 = vmatpush.msra.mxu0 0.0
        %490 = vmatpush.msra.mxu0 0.0
        %491 = vmatpush.msra.mxu0 0.0
        %492 = vmatpush.msra.mxu0 0.0
        %493 = vmatpush.msra.mxu0 0.0
        %494 = vmatpush.msra.mxu0 0.0
        %495 = vmatpush.msra.mxu0 0.0
        %496 = vmatpush.msra.mxu0 0.0
        %497 = vmatpush.msra.mxu0 0.0
        %498 = vmatpush.msra.mxu0 0.0
        %499 = vmatpush.msra.mxu0 0.0
        %500 = vmatpush.msra.mxu0 %v275
        %501 = vmatpush.msra.mxu0 %v274
        %502 = vmatmul.f32.gmra.mxu0 %v484
        %v503 = vpop.f32.mrf.mxu0
        %v504 = vadd.f32 %v284, %v503
        %505 = vdwg.mxu0
        %vm506 = vcmask 64512
        %507 = vst.msk [vmem:[%s239] sm:$0xff] %vm506, %v339
        %508 = vst.msk [vmem:[%s239 + $0x8] sm:$0xff] %vm506, %v394
        %509 = vst.msk [vmem:[%s239 + $0x10] sm:$0xff] %vm506, %v449
        %510 = vst.msk [vmem:[%s239 + $0x18] sm:$0xff] %vm506, %v504
        %v511 = vld [vmem:[%s1] sm:$0xff]
        %512 = vmatpush.msra.mxu0 0.0
        %513 = vmatpush.msra.mxu0 0.0
        %514 = vmatpush.msra.mxu0 0.0
        %515 = vmatpush.msra.mxu0 0.0
        %516 = vmatpush.msra.mxu0 0.0
        %517 = vmatpush.msra.mxu0 0.0
        %518 = vmatpush.msra.mxu0 0.0
        %519 = vmatpush.msra.mxu0 0.0
        %520 = vmatpush.msra.mxu0 0.0
        %521 = vmatpush.msra.mxu0 0.0
        %522 = vmatpush.msra.mxu0 0.0
        %523 = vmatpush.msra.mxu0 0.0
        %524 = vmatpush.msra.mxu0 0.0
        %525 = vmatpush.msra.mxu0 0.0
        %526 = vmatpush.msra.mxu0 %v277
        %527 = vmatpush.msra.mxu0 %v276
        %528 = vmatmul.f32.gmra.mxu0 %v319
        %v529 = vpop.f32.mrf.mxu0
        %v530 = vadd.f32 %v511, %v529
        %531 = vdwg.mxu0
        %532 = vmatpush.msra.mxu0 0.0
        %533 = vmatpush.msra.mxu0 0.0
        %534 = vmatpush.msra.mxu0 0.0
        %535 = vmatpush.msra.mxu0 0.0
        %536 = vmatpush.msra.mxu0 0.0
        %537 = vmatpush.msra.mxu0 0.0
        %538 = vmatpush.msra.mxu0 0.0
        %539 = vmatpush.msra.mxu0 0.0
        %540 = vmatpush.msra.mxu0 0.0
        %541 = vmatpush.msra.mxu0 0.0
        %542 = vmatpush.msra.mxu0 0.0
        %543 = vmatpush.msra.mxu0 0.0
        %544 = vmatpush.msra.mxu0 0.0
        %545 = vmatpush.msra.mxu0 0.0
        %546 = vmatpush.msra.mxu0 %v279
        %547 = vmatpush.msra.mxu0 %v278
        %548 = vmatmul.f32.gmra.mxu0 %v374
        %v549 = vpop.f32.mrf.mxu0
        %v550 = vadd.f32 %v511, %v549
        %551 = vdwg.mxu0
        %552 = vmatpush.msra.mxu0 0.0
        %553 = vmatpush.msra.mxu0 0.0
        %554 = vmatpush.msra.mxu0 0.0
        %555 = vmatpush.msra.mxu0 0.0
        %556 = vmatpush.msra.mxu0 0.0
        %557 = vmatpush.msra.mxu0 0.0
        %558 = vmatpush.msra.mxu0 0.0
        %559 = vmatpush.msra.mxu0 0.0
        %560 = vmatpush.msra.mxu0 0.0
        %561 = vmatpush.msra.mxu0 0.0
        %562 = vmatpush.msra.mxu0 0.0
        %563 = vmatpush.msra.mxu0 0.0
        %564 = vmatpush.msra.mxu0 0.0
        %565 = vmatpush.msra.mxu0 0.0
        %566 = vmatpush.msra.mxu0 %v281
        %567 = vmatpush.msra.mxu0 %v280
        %568 = vmatmul.f32.gmra.mxu0 %v429
        %v569 = vpop.f32.mrf.mxu0
        %v570 = vadd.f32 %v511, %v569
        %571 = vdwg.mxu0
        %572 = vmatpush.msra.mxu0 0.0
        %573 = vmatpush.msra.mxu0 0.0
        %574 = vmatpush.msra.mxu0 0.0
        %575 = vmatpush.msra.mxu0 0.0
        %576 = vmatpush.msra.mxu0 0.0
        %577 = vmatpush.msra.mxu0 0.0
        %578 = vmatpush.msra.mxu0 0.0
        %579 = vmatpush.msra.mxu0 0.0
        %580 = vmatpush.msra.mxu0 0.0
        %581 = vmatpush.msra.mxu0 0.0
        %582 = vmatpush.msra.mxu0 0.0
        %583 = vmatpush.msra.mxu0 0.0
        %584 = vmatpush.msra.mxu0 0.0
        %585 = vmatpush.msra.mxu0 0.0
        %586 = vmatpush.msra.mxu0 %v283
        %587 = vmatpush.msra.mxu0 %v282
        %588 = vmatmul.f32.gmra.mxu0 %v484
        %v589 = vpop.f32.mrf.mxu0
        %v590 = vadd.f32 %v511, %v589
        %591 = vdwg.mxu0
        %vm592 = vcmask 31744
        %593 = vst.msk [vmem:[%s266] sm:$0xff] %vm592, %v530
        %594 = vst.msk [vmem:[%s266 + $0x8] sm:$0xff] %vm592, %v550
        %595 = vst.msk [vmem:[%s266 + $0x10] sm:$0xff] %vm592, %v570
        %596 = vst.msk [vmem:[%s266 + $0x18] sm:$0xff] %vm592, %v590
        %s597 = sand.u32 %s122, 1
        %s598 = scalar_lea.sflag [#allocation3], %s597
        %s599 = sand.u32 %s122, 1
        %s600 = smul.addr %s599, 32
        %s601 = scalar_lea.vmem [#allocation2], %s600
        %s602 = smul.u32 4, %s20
        %p603 = scmp.lt.s32.totalorder %s602, 7
        %s604 = scalar_select %p603, %s602, 7
        %s605 = smul.addr %s604, 8
        %s606 = scalar_lea.vmem %s5, %s605
        // Predicated region
        $region37: #{tpu_custom_call.1} parent=35 // pred_check
          %p607 = pneg %p132
        $region38: #{tpu_custom_call.1} parent=35 // pred_check_branch
          %609 = sbr.rel (%p607) target = $region40
        $region39: #{tpu_custom_call.1} parent=35 // pred_region
          %s610 = smul.u32 4, %s20
          %612 = vsyncadd %s598, 0
          %s613 = smul.addr %s610, 8
          %s614 = scalar_lea.hbm %s4, %s613
          %s615 = sshll.u32 %s601, 4
          %s616 = int_to_ptr.vmem [resolvable:$true] %s615
          %s617 = sshll.u32 %s614, 4
          %s618 = int_to_ptr.hbm [resolvable:$true] %s617
          %623 = dma.vmem_to_hbm [thread:$0]  %s616, 512, %s618, %s598, 128, 128, 8
        $region40: #{tpu_custom_call.1} parent=35 // pred_fallthru
          _
        // Predicated region
        $region41: #{tpu_custom_call.1} parent=35 // pred_check
          %p624 = pneg %p158
        $region42: #{tpu_custom_call.1} parent=35 // pred_check_branch
          %626 = sbr.rel (%p624) target = $region44
        $region43: #{tpu_custom_call.1} parent=35 // pred_region
          %s627 = smul.u32 4, %s20
        $region44: #{tpu_custom_call.1} parent=35 // pred_fallthru
          _
      $region36: #{tpu_custom_call.1} parent=5 // pred_fallthru
        _
      %p628 = scmp.le.s32.totalorder 2, %s15
      // Predicated region
      $region45: #{tpu_custom_call.1} parent=5 // pred_check
        %p629 = pneg %p628
      $region46: #{tpu_custom_call.1} parent=5 // pred_check_branch
        %631 = sbr.rel (%p629) target = $region48
      $region47: #{tpu_custom_call.1} parent=5 // pred_region
        %s632 = ssub.s32 %s15, 2
        // Predicated region
        $region49: #{tpu_custom_call.1} parent=47 // pred_check
          %p633 = pneg %p138
        $region50: #{tpu_custom_call.1} parent=47 // pred_check_branch
          %635 = sbr.rel (%p633) target = $region52
        $region51: #{tpu_custom_call.1} parent=47 // pred_region
          %s636 = sand.u32 %s123, 1
          %s637 = scalar_lea.sflag [#allocation3], %s636
          %s638 = sand.u32 %s123, 1
          %s639 = smul.addr %s638, 32
          %s640 = scalar_lea.vmem [#allocation2], %s639
          %642 = dma.done %s637, 512
        $region52: #{tpu_custom_call.1} parent=47 // pred_fallthru
          _
        // Predicated region
        $region53: #{tpu_custom_call.1} parent=47 // pred_check
          %p643 = pneg %p164
        $region54: #{tpu_custom_call.1} parent=47 // pred_check_branch
          %645 = sbr.rel (%p643) target = $region56
        $region55: #{tpu_custom_call.1} parent=47 // pred_region
          %s646 = smul.u32 4, %s21
          %p647 = scmp.lt.s32.totalorder %s646, 7
          %s648 = scalar_select %p647, %s646, 7
          %s649 = smul.addr %s648, 8
          %s650 = scalar_lea.vmem %s5, %s649
        $region56: #{tpu_custom_call.1} parent=47 // pred_fallthru
          _
      $region48: #{tpu_custom_call.1} parent=5 // pred_fallthru
        _
    $region6: #{tpu_custom_call.1} parent=1 // loop_footer
      %s19 = sadd.s32 1, %s15
    $region7: #{tpu_custom_call.1} parent=1 // loop_footer_branch
      %14 = sbr.rel target = $region3
    $region8: #{tpu_custom_call.1} parent=1 // loop_exit
      _
    %651 = vsyncpa [#allocation3], 1
    %s652 = scalar_lea.sflag [#allocation3], 1
    %653 = vsyncpa %s652, 1

</llo_original>
